<compile_context>
chip_gen: v5e
topology: v5e:2x2
jax: 0.10.0
libtpu: 0.0.40
codegen_flags: <defaults>
</compile_context>

<pallas_src>
import math

import jax
import jax.numpy as jnp
from jax.experimental import pallas as pl
from jax.experimental.pallas import tpu as pltpu

HEADS = 32  # fixed by the module: att_weight has 32 rows


def _project_kernel(x_ref, w_ref, out_ref):
    """Stage 1: node_logits = x @ att_weight.T for one block of nodes.

    x_ref  : VMEM (TN, F) f32  -- node-feature block
    w_ref  : VMEM (F, 32) f32  -- att_weight pre-transposed (resident)
    out_ref: VMEM (TN, 32) f32 -- per-node attention logits
    """
    out_ref[...] = jnp.dot(
        x_ref[...], w_ref[...], preferred_element_type=jnp.float32
    ).astype(out_ref.dtype)


def _attn_kernel(idx_ref, nl_ref, out_ref):
    """Stage 2: one grid step == TE hyperedges (gather + softmax over K).

    idx_ref: VMEM (TE, K) int32   -- member-node indices of this block
    nl_ref : VMEM (N_pad, 32) f32 -- per-node logits, resident in VMEM
    out_ref: VMEM (TE, K*32) f32  -- lane-dense attention block
    """
    TE, K = idx_ref.shape
    N, H = nl_ref.shape
    rows = TE * K

    # Gather the member-node logit rows with a one-hot matmul on the MXU:
    #   logits[r, :] = node_logits[idx_flat[r], :]
    idx = idx_ref[...].reshape(rows, 1)                           # (rows, 1)
    iota = jax.lax.broadcasted_iota(jnp.int32, (rows, N), 1)      # (rows, N)
    one_hot = (iota == idx).astype(jnp.float32)                   # (rows, N)
    logits = jnp.dot(one_hot, nl_ref[...],
                     preferred_element_type=jnp.float32)          # (rows, H)

    # softmax over the member-node axis (torch dim=1 of the (E, K, 32) tensor)
    l3 = logits.reshape(TE, K, H)
    m = jnp.max(l3, axis=1, keepdims=True)                        # (TE, 1, H)
    p = jnp.exp(l3 - m)                                           # (TE, K, H)
    s = jnp.sum(p, axis=1, keepdims=True)                         # (TE, 1, H)
    attn = p * pl.reciprocal(s, approx=True)                      # EUP reciprocal

    # Lane-dense store: (TE, K*H) with K*H a multiple of 128 in typical configs.
    out_ref[...] = attn.reshape(TE, K * H).astype(out_ref.dtype)


def attention_layer(x, hyperedge_index, att_weight, *, target_rows=512):
    """Pallas implementation of AttentionLayer.forward.

    x               : (N, F) float32 node features
    hyperedge_index : (E, K) int32   member-node indices per hyperedge
    att_weight      : (32, F) float32
    returns         : (E, K, 32) float32 attention (softmax over K)
    """
    N, F = x.shape
    E, K = hyperedge_index.shape
    H, F2 = att_weight.shape
    assert F == F2 and H == HEADS

    x = x.astype(jnp.float32)
    w_t = att_weight.astype(jnp.float32).T                 # (F, H): hoisted transpose

    # ---------------- Stage 1: node_logits = x @ att_weight.T ----------------
    TN = min(N, 512)
    if TN < N:
        TN = max(8, (TN // 8) * 8)                         # sublane-aligned node blocks
    N_pad = -(-N // TN) * TN
    x_p = x if N_pad == N else jnp.concatenate(
        [x, jnp.zeros((N_pad - N, F), x.dtype)], axis=0)

    node_logits = pl.pallas_call(
        _project_kernel,
        out_shape=jax.ShapeDtypeStruct((N_pad, H), jnp.float32),
        grid=(N_pad // TN,),
        in_specs=[
            pl.BlockSpec((TN, F), lambda i: (i, 0)),       # node-feature block
            pl.BlockSpec((F, H), lambda i: (0, 0)),        # w_t resident
        ],
        out_specs=pl.BlockSpec((TN, H), lambda i: (i, 0)),
        compiler_params=pltpu.CompilerParams(
            dimension_semantics=("parallel",)),
    )(x_p, w_t)

    # --------------- Stage 2: gather member logits + softmax -----------------
    K_H = K * H
    # Hyperedges per grid step: ~target_rows gathered rows, TE a multiple of 8
    # (sublane alignment of the (TE, K*H) output block); cap near ceil(E/2) so
    # v7x's two TensorCores both get blocks when E is large enough.
    TE = max(1, target_rows // max(K, 1))
    TE = max(8, (TE // 8) * 8)
    half = -(-E // 2)
    if half >= 8:
        TE = min(TE, ((half + 7) // 8) * 8)
    if TE >= E:
        TE = E                                             # single block == full dim (OK)
    E_pad = -(-E // TE) * TE

    idx = hyperedge_index.astype(jnp.int32)
    if E_pad != E:
        # Pad with index 0 (a valid node) -> padded hyperedges produce finite
        # softmax rows that are sliced off below.
        idx = jnp.concatenate([idx, jnp.zeros((E_pad - E, K), jnp.int32)], axis=0)

    # Rough VMEM footprint estimate; raise the scoped limit only when needed
    # (v5e scoped default is 16 MiB even though physical VMEM is 128 MiB).
    est_vmem = (2 * N_pad * H * 4            # resident node_logits (double-buffered)
                + 2 * TE * K * 4             # index block
                + 2 * TE * K_H * 4           # output block
                + 2 * TE * K * N_pad * 4)    # in-kernel one-hot / gathered temporaries
    cp_kwargs = dict(dimension_semantics=("parallel",))
    if est_vmem > 12 * 1024 * 1024:
        cp_kwargs["vmem_limit_bytes"] = int(min(64 * 1024 * 1024, 2 * est_vmem))

    attn_flat = pl.pallas_call(
        _attn_kernel,
        out_shape=jax.ShapeDtypeStruct((E_pad, K_H), jnp.float32),
        grid=(E_pad // TE,),
        in_specs=[
            pl.BlockSpec((TE, K), lambda e: (e, 0)),       # per-step index block (VMEM)
            pl.BlockSpec((N_pad, H), lambda e: (0, 0)),    # node_logits resident
        ],
        out_specs=pl.BlockSpec((TE, K_H), lambda e: (e, 0)),  # lane-dense output
        compiler_params=pltpu.CompilerParams(**cp_kwargs),
    )(idx, node_logits)

    return attn_flat[:E].reshape(E, K, H)


if __name__ == "__main__":
    key = jax.random.PRNGKey(0)
    N, F, E, K = 16, 64, 4, 8          # nodes, in_features, hyperedges, nodes/edge
    kx, kw, ki = jax.random.split(key, 3)

    # Deterministic inputs / parameters (matches reset_parameters: U(-stdv, stdv)).
    x = jax.random.normal(kx, (N, F), dtype=jnp.float32)
    stdv = 1.0 / math.sqrt(F)
    att_weight = jax.random.uniform(kw, (HEADS, F), dtype=jnp.float32,
                                    minval=-stdv, maxval=stdv)
    hyperedge_index = jax.random.randint(ki, (E, K), 0, N, dtype=jnp.int32)

    attn = attention_layer(x, hyperedge_index, att_weight)
    attn = jax.block_until_ready(attn)

    # Pure-JAX reference (mirrors the PyTorch forward exactly).
    feats_ref = x[hyperedge_index]                               # (E, K, F)
    logits_ref = jnp.einsum("ekf,hf->ekh", feats_ref, att_weight)
    ref = jax.nn.softmax(logits_ref, axis=1)

    assert attn.shape == (E, K, HEADS)
    # Tolerance loosened for pl.reciprocal(approx=True) in the softmax denom.
    assert jnp.allclose(attn, ref, atol=2e-3, rtol=2e-3)
    print("KERNEL_OK")
</pallas_src>

<mosaic_0001>
module attributes {stable_mosaic.version = 11 : i64} {
  func.func @_project_kernel(%arg0: i32, %arg1: memref<16x64xf32, #tpu.memory_space<vmem>>, %arg2: memref<64x32xf32, #tpu.memory_space<vmem>>, %arg3: memref<16x32xf32, #tpu.memory_space<vmem>>) attributes {dimension_semantics = [#tpu.dimension_semantics<parallel>], iteration_bounds = array<i64: 1>, scalar_prefetch = 0 : i64, scratch_operands = 0 : i64, tpu.core_type = #tpu.core_type<tc>, window_params = [{transform_indices = @transform_0, window_bounds = array<i64: 16, 64>}, {pipeline_mode = #tpu.pipeline_mode<synchronous>, transform_indices = @transform_1, window_bounds = array<i64: 64, 32>}, {transform_indices = @transform_2, window_bounds = array<i64: 16, 32>}]} {
    %c0 = arith.constant 0 : index
    %c0_0 = arith.constant 0 : index
    %0 = vector.load %arg1[%c0, %c0_0] : memref<16x64xf32, #tpu.memory_space<vmem>>, vector<16x64xf32>
    %c0_1 = arith.constant 0 : index
    %c0_2 = arith.constant 0 : index
    %1 = vector.load %arg2[%c0_1, %c0_2] : memref<64x32xf32, #tpu.memory_space<vmem>>, vector<64x32xf32>
    %cst = arith.constant dense<0.000000e+00> : vector<16x32xf32>
    %2 = tpu.matmul %0, %1, %cst {dimension_numbers = #tpu.dot_dimension_numbers<[1], [0], [0], [1], [0, 0, 1, 1], [], []>} : vector<16x64xf32>, vector<64x32xf32>, vector<16x32xf32> -> vector<16x32xf32>
    %c0_3 = arith.constant 0 : index
    %c0_4 = arith.constant 0 : index
    %3 = vector.load %arg3[%c0_3, %c0_4] : memref<16x32xf32, #tpu.memory_space<vmem>>, vector<16x32xf32>
    tpu.vector_store %arg3[%c0_3, %c0_4], %2 {strides = array<i32>} : memref<16x32xf32, #tpu.memory_space<vmem>>, vector<16x32xf32>,
    return
  }
  func.func @transform_0(%arg0: i32) -> (i32, i32) {
    %c0_i32 = arith.constant 0 : i32
    %c0_i32_0 = arith.constant 0 : i32
    return %arg0, %c0_i32 : i32, i32
  }
  func.func @transform_1(%arg0: i32) -> (i32, i32) {
    %c0_i32 = arith.constant 0 : i32
    %c0_i32_0 = arith.constant 0 : i32
    %c0_i32_1 = arith.constant 0 : i32
    return %c0_i32, %c0_i32_0 : i32, i32
  }
  func.func @transform_2(%arg0: i32) -> (i32, i32) {
    %c0_i32 = arith.constant 0 : i32
    %c0_i32_0 = arith.constant 0 : i32
    return %arg0, %c0_i32 : i32, i32
  }
}

</mosaic_0001>

<llo_original>
// kernel: tpu_custom_call.1
$region0: #{tpu_custom_call.1}
  #allocation0 [shape = 'u32[]', space=smem, size = 0x4, offset = 0x4, fixed_abs, tag = 'smem constant byte address 0x4 - core index']
  #allocation1 [shape = 'u32[72,128]{1,0:T(1,128)}', space=vmem, size = 0x9000, scoped, tag = 'internal scratch']
  %s0 = inlined_call_operand.vmem [shape: f32[16,64], index: 0, kind: input, shape index: {}]
  %s1 = inlined_call_operand.vmem [shape: f32[64,32], index: 1, kind: input, shape index: {}]
  %s2 = inlined_call_operand.hbm [shape: f32[16,32], index: 2, kind: output, shape index: {}]
  %s3 = sld [smem:[#allocation0]]
  $region18: #{tpu_custom_call.1} parent=0
    _
  %s5 = ssub.s32 1, %s3
  %s6 = scalar_select 0, %s5, %s3
  $region1: #{tpu_custom_call.1} parent=0
    #allocation2 [shape = 'u8[8192]{0}', space=vmem, size = 0x2000, scoped, tag = 'output window, operand 0, single buffered']
    #allocation3 [shape = 's32[1]{0}', space=sflag, size = 0x4, scoped, tag = 'scoped memory for tpu_custom_call.1']
    %7 = vsyncpa [#allocation3], 0
    // Predicated region
    $region2: #{tpu_custom_call.1} parent=1 // pred_check
      _
    $region3: #{tpu_custom_call.1} parent=1 // pred_check_branch
      %9 = sbr.rel (0) target = $region5
    $region4: #{tpu_custom_call.1} parent=1 // pred_region
      _
    $region5: #{tpu_custom_call.1} parent=1 // pred_fallthru
      _
    // Predicated region
    $region6: #{tpu_custom_call.1} parent=1 // pred_check
      _
    $region7: #{tpu_custom_call.1} parent=1 // pred_check_branch
      %11 = sbr.rel (0) target = $region9
    $region8: #{tpu_custom_call.1} parent=1 // pred_region
      _
    $region9: #{tpu_custom_call.1} parent=1 // pred_fallthru
      _
    %v12 = vld [vmem:[%s0] sm:$0xff]
    %v13 = vld [vmem:[%s0 + $0x8] sm:$0xff]
    %v14 = vld [vmem:[%s1] sm:$0xff]
    %v15 = vld [vmem:[%s1 + $0x8] sm:$0xff]
    %v16 = vld [vmem:[%s1 + $0x10] sm:$0xff]
    %v17 = vld [vmem:[%s1 + $0x18] sm:$0xff]
    %v18 = vld [vmem:[%s1 + $0x20] sm:$0xff]
    %v19 = vld [vmem:[%s1 + $0x28] sm:$0xff]
    %v20 = vld [vmem:[%s1 + $0x30] sm:$0xff]
    %v21 = vld [vmem:[%s1 + $0x38] sm:$0xff]
    %vm22 = vcmask 523264
    %v24 = vsel %vm22, %v12, 0
    %v27 = vsel %vm22, %v13, 0
    %29 = vmatpush.msra.mxu0 0.0
    %30 = vmatpush.msra.mxu0 0.0
    %31 = vmatpush.msra.mxu0 0.0
    %32 = vmatpush.msra.mxu0 0.0
    %33 = vmatpush.msra.mxu0 0.0
    %34 = vmatpush.msra.mxu0 0.0
    %35 = vmatpush.msra.mxu0 0.0
    %36 = vmatpush.msra.mxu0 0.0
    %37 = vmatpush.msra.mxu0 %v21
    %38 = vmatpush.msra.mxu0 %v20
    %39 = vmatpush.msra.mxu0 %v19
    %40 = vmatpush.msra.mxu0 %v18
    %41 = vmatpush.msra.mxu0 %v17
    %42 = vmatpush.msra.mxu0 %v16
    %43 = vmatpush.msra.mxu0 %v15
    %44 = vmatpush.msra.mxu0 %v14
    %45 = vmatmul.f32.gmra.mxu0 %v24
    %v46 = vpop.f32.mrf.mxu0
    %v47 = vadd.f32 0.0, %v46
    %48 = vmatmul.f32.gmra.mxu0 %v27
    %v49 = vpop.f32.mrf.mxu0
    %v50 = vadd.f32 0.0, %v49
    %51 = vdwg.mxu0
    %vm52 = vcmask 261120
    %53 = vst.msk [vmem:[#allocation2] sm:$0xff] %vm52, %v47
    %54 = vst.msk [vmem:[#allocation2 + $0x8] sm:$0xff] %vm52, %v50
    // Predicated region
    $region10: #{tpu_custom_call.1} parent=1 // pred_check
      _
    $region11: #{tpu_custom_call.1} parent=1 // pred_check_branch
      %56 = sbr.rel (0) target = $region13
    $region12: #{tpu_custom_call.1} parent=1 // pred_region
      %58 = vsyncadd [#allocation3], 0
      %s59 = sshll.u32 [#allocation2], 4
      %s60 = int_to_ptr.vmem [resolvable:$true] %s59
      %s61 = sshll.u32 %s2, 4
      %s62 = int_to_ptr.hbm [resolvable:$true] %s61
      %67 = dma.vmem_to_hbm [thread:$0]  %s60, 256, %s62, [#allocation3], 128, 128, 8
    $region13: #{tpu_custom_call.1} parent=1 // pred_fallthru
      _
    // Predicated region
    $region14: #{tpu_custom_call.1} parent=1 // pred_check
      _
    $region15: #{tpu_custom_call.1} parent=1 // pred_check_branch
      %69 = sbr.rel (0) target = $region17
    $region16: #{tpu_custom_call.1} parent=1 // pred_region
      %71 = dma.done [#allocation3], 256
    $region17: #{tpu_custom_call.1} parent=1 // pred_fallthru
      _
    %72 = vsyncpa [#allocation3], 1

</llo_original>
